<compile_context>
chip_gen: v6e
topology: v6e:2x2x1
jax: 0.10.0
libtpu: 0.0.40
codegen_flags: <defaults>
</compile_context>

<pallas_src>
import functools

import jax
import jax.numpy as jnp
from jax.experimental import pallas as pl
from jax.experimental.pallas import tpu as pltpu


# ---------------------------------------------------------------------------
# Fused Pallas kernel: one grid step == `bsz` batch elements.
#   cols_ref: (K, bsz*HW)         bf16   transposed im2col patches (col = b*HW+hw)
#   wc_ref  : (csel, K)           bf16   conv weight, channel-selected
#   bc_ref  : (csel, 1)           f32    conv bias, channel-selected
#   wf_ref  : (csel, HW, Opad)    bf16   fc weight permuted to (c, hw, o), o zero-padded
#   bf_ref  : (1, Opad)           f32    fc bias, zero-padded
#   o_ref   : (bsz, 1, Opad)      f32    output rows for this batch block
# ---------------------------------------------------------------------------
def _fused_kernel(cols_ref, wc_ref, bc_ref, wf_ref, bf_ref, o_ref,
                  *, bsz, csel, hw):
    # Conv for the whole batch block in one MXU matmul, f32 accumulation.
    act = jnp.dot(wc_ref[...], cols_ref[...],
                  preferred_element_type=jnp.float32)        # (csel, bsz*HW)
    act = jnp.maximum(act + bc_ref[...], 0.0)                # f32 VPU (v5e-safe)
    act = act.astype(wf_ref.dtype)                           # bf16 feed for fc MXU

    bias_fc = bf_ref[...]                                    # (1, Opad) f32
    wf = [wf_ref[c] for c in range(csel)]                    # hoisted weight loads

    # fc: out[b, o] = bf[o] + sum_{c,hw} act[c, b*HW+hw] * wf[c, hw, o]
    # -> csel lane-dense MXU matmuls per batch element, f32 accumulation.
    for b in range(bsz):
        a_b = act[:, b * hw:(b + 1) * hw]                    # (csel, HW) static slice
        acc = bias_fc
        for c in range(csel):
            acc = acc + jnp.dot(a_b[c:c + 1, :], wf[c],
                                preferred_element_type=jnp.float32)  # (1, Opad)
        o_ref[b] = acc.astype(o_ref.dtype)


def _default_block_b(n, hw, k, *, unroll_cap=32, cols_budget_bytes=8 << 20):
    """Pick a batch block: amortize per-step overhead but keep >= 2 grid steps
    (v7x has 2 TensorCores) and keep the double-buffered cols block small
    enough for every generation's scoped-VMEM default (v7x: 32 MiB / 64 MiB)."""
    per_elem = 2 * (hw * k * 2)           # 2 pipeline buffers, bf16 cols bytes
    cap = max(1, cols_budget_bytes // max(per_elem, 1))
    if n < 2:
        return 1
    return int(max(1, min(cap, n // 2, unroll_cap, n)))


def _fused_forward_pallas(cols, wc, bc, wf, bf, *, n, hw, block_b):
    k = cols.shape[0]
    csel, hw2, o_pad = wf.shape
    assert hw2 == hw

    n_blocks = pl.cdiv(n, block_b)
    n_pad = n_blocks * block_b
    if n_pad != n:                         # pad batch to a block multiple
        cols = jnp.pad(cols, ((0, 0), (0, (n_pad - n) * hw)))

    kernel = functools.partial(_fused_kernel, bsz=block_b, csel=csel, hw=hw)

    flops = int(n_pad * (2 * csel * k * hw + 2 * csel * hw * o_pad
                         + 3 * csel * hw))
    bytes_accessed = int(cols.size * cols.dtype.itemsize
                         + wc.size * wc.dtype.itemsize
                         + bc.size * 4
                         + wf.size * wf.dtype.itemsize
                         + bf.size * 4
                         + n_pad * o_pad * 4)

    out3 = pl.pallas_call(
        kernel,
        out_shape=jax.ShapeDtypeStruct((n_pad, 1, o_pad), jnp.float32),
        grid=(n_blocks,),
        in_specs=[
            pl.BlockSpec((k, block_b * hw), lambda i: (0, i)),
            pl.BlockSpec((csel, k), lambda i: (0, 0)),
            pl.BlockSpec((csel, 1), lambda i: (0, 0)),
            pl.BlockSpec((csel, hw, o_pad), lambda i: (0, 0, 0)),
            pl.BlockSpec((1, o_pad), lambda i: (0, 0)),
        ],
        out_specs=pl.BlockSpec((block_b, 1, o_pad), lambda i: (i, 0, 0)),
        compiler_params=pltpu.CompilerParams(
            dimension_semantics=("parallel",),
            vmem_limit_bytes=32 << 20),
        cost_estimate=pl.CostEstimate(flops=flops, transcendentals=0,
                                      bytes_accessed=bytes_accessed),
    )(cols, wc, bc, wf, bf)
    return out3                              # (n_pad, 1, o_pad) f32


# ---------------------------------------------------------------------------
# Glue: transposed im2col for 3x3 / pad=1 / stride=1 conv (NCHW input,
# PyTorch weight row order ci*9 + kh*3 + kw).  No K zero-padding.  Runs fused
# under the same jit as the pallas_call.
# ---------------------------------------------------------------------------
def im2col_3x3_T(x):
    N, C, H, W = x.shape
    xp = jnp.pad(x, ((0, 0), (0, 0), (1, 1), (1, 1)))
    taps = [xp[:, :, i:i + H, j:j + W] for i in range(3) for j in range(3)]
    p = jnp.stack(taps, axis=2)                       # (N, C, 9, H, W)
    p = p.reshape(N, C * 9, H * W)                    # rows k = ci*9 + kh*3 + kw
    return p.transpose(1, 0, 2).reshape(C * 9, N * H * W)   # cols = n*HW + h*W + w


# ---------------------------------------------------------------------------
# One-time parameter preparation (outside the per-step forward):
#   - fold channel selection into conv weight/bias
#   - permute the fc weight to (c, hw, o) so it consumes the kernel's
#     channel-major activation directly (matches PyTorch's (C,H,W) flatten)
#   - zero-pad fc_out to a lane-dense 128 multiple
#   - cast MXU operands to bf16; biases stay f32
# ---------------------------------------------------------------------------
def prepare_transferred_net_params(params, channel, H, W,
                                   mxu_dtype=jnp.bfloat16):
    conv_w, conv_b = params["conv_w"], params["conv_b"]   # (Cout,Cin,3,3),(Cout,)
    fc_w, fc_b = params["fc_w"], params["fc_b"]           # (fc_out,fc_in),(fc_out,)
    Cout, Cin, KH, KW = conv_w.shape
    fc_out = fc_w.shape[0]
    HW = H * W

    ch = jnp.arange(Cout) if channel is None else jnp.asarray(channel)
    csel = int(ch.shape[0])
    assert fc_w.shape[1] == csel * HW, "fc_in must equal len(channel)*H*W"

    K = Cin * KH * KW
    o_pad = max(128, ((fc_out + 127) // 128) * 128)

    wc = conv_w.reshape(Cout, K)[ch].astype(mxu_dtype)                 # (csel, K)
    bc = conv_b[ch].reshape(csel, 1).astype(jnp.float32)               # (csel, 1)
    # fc_w column index = c*HW + h*W + w  ->  wf[c, hw, o], o zero-padded
    wf = fc_w.reshape(fc_out, csel, HW).transpose(1, 2, 0)             # (csel, HW, fc_out)
    wf = jnp.pad(wf, ((0, 0), (0, 0), (0, o_pad - fc_out))).astype(mxu_dtype)
    bf = jnp.pad(fc_b, (0, o_pad - fc_out)).reshape(1, o_pad).astype(jnp.float32)
    return {"wc": wc, "bc": bc, "wf": wf, "bf": bf}


@functools.partial(jax.jit, static_argnames=("fc_out", "block_b"))
def transferred_net_forward(x, kparams, *, fc_out, block_b=None):
    """x: (N, Cin, H, W) f32 NCHW -> (N, fc_out) f32 (same semantics as the
    PyTorch TransferredNet with a Conv2d(3x3,pad=1)+ReLU truncated_net)."""
    N, Cin, H, W = x.shape
    wc, bc, wf, bf = kparams["wc"], kparams["bc"], kparams["wf"], kparams["bf"]
    csel, HW, o_pad = wf.shape
    K = wc.shape[1]
    assert HW == H * W

    cols = im2col_3x3_T(x).astype(wc.dtype)             # (K, N*HW) bf16
    if block_b is None:
        block_b = _default_block_b(N, HW, K)
    out3 = _fused_forward_pallas(cols, wc, bc, wf, bf,
                                 n=N, hw=HW, block_b=block_b)
    return out3.reshape(out3.shape[0], o_pad)[:N, :fc_out]


# ---------------------------------------------------------------------------
# Deterministic synthetic parameters + plain-JAX reference for validation
# ---------------------------------------------------------------------------
def init_params(key, cin, cout, fc_in, fc_out):
    k1, k2, k3, k4 = jax.random.split(key, 4)
    return {
        "conv_w": 0.1 * jax.random.normal(k1, (cout, cin, 3, 3), jnp.float32),
        "conv_b": 0.1 * jax.random.normal(k2, (cout,), jnp.float32),
        "fc_w": 0.05 * jax.random.normal(k3, (fc_out, fc_in), jnp.float32),
        "fc_b": 0.05 * jax.random.normal(k4, (fc_out,), jnp.float32),
    }


def reference_forward(x, params, channel):
    conv = jax.lax.conv_general_dilated(
        x, params["conv_w"], (1, 1), "SAME",
        dimension_numbers=("NCHW", "OIHW", "NCHW"))
    conv = jax.nn.relu(conv + params["conv_b"][None, :, None, None])
    if channel is not None:
        conv = conv[:, jnp.asarray(channel)]
    feat = conv.reshape(conv.shape[0], -1)
    return feat @ params["fc_w"].T + params["fc_b"]


if __name__ == "__main__":
    key = jax.random.PRNGKey(0)
    kx, kp = jax.random.split(key)

    N, Cin, H, W = 2, 4, 16, 16
    Cout = 8
    channel = (0, 2, 4, 6)               # select 4 of the 8 conv output channels
    fc_in = len(channel) * H * W         # 4 * 16 * 16 = 1024
    fc_out = 10

    x = jax.random.normal(kx, (N, Cin, H, W), jnp.float32)
    params = init_params(kp, Cin, Cout, fc_in, fc_out)

    kparams = prepare_transferred_net_params(params, channel, H, W)
    out = transferred_net_forward(x, kparams, fc_out=fc_out)
    out = jax.block_until_ready(out)

    assert out.shape == (N, fc_out), out.shape
    assert bool(jnp.all(jnp.isfinite(out)))

    ref = jax.block_until_ready(reference_forward(x, params, channel))
    assert bool(jnp.allclose(out, ref, rtol=5e-2, atol=5e-2)), (
        "mismatch vs reference", out, ref)

    print("KERNEL_OK")
</pallas_src>

<mosaic_0001>
module attributes {stable_mosaic.version = 11 : i64} {
  func.func @_fused_kernel(%arg0: i32, %arg1: memref<36x256xbf16, #tpu.memory_space<vmem>>, %arg2: memref<4x36xbf16, #tpu.memory_space<vmem>>, %arg3: memref<4x1xf32, #tpu.memory_space<vmem>>, %arg4: memref<4x256x128xbf16, #tpu.memory_space<vmem>>, %arg5: memref<1x128xf32, #tpu.memory_space<vmem>>, %arg6: memref<1x1x128xf32, #tpu.memory_space<vmem>>) attributes {dimension_semantics = [#tpu.dimension_semantics<parallel>], iteration_bounds = array<i64: 2>, scalar_prefetch = 0 : i64, scratch_operands = 0 : i64, tpu.core_type = #tpu.core_type<tc>, window_params = [{transform_indices = @transform_0, window_bounds = array<i64: 36, 256>}, {pipeline_mode = #tpu.pipeline_mode<synchronous>, transform_indices = @transform_1, window_bounds = array<i64: 4, 36>}, {pipeline_mode = #tpu.pipeline_mode<synchronous>, transform_indices = @transform_2, window_bounds = array<i64: 4, 1>}, {pipeline_mode = #tpu.pipeline_mode<synchronous>, transform_indices = @transform_3, window_bounds = array<i64: 4, 256, 128>}, {pipeline_mode = #tpu.pipeline_mode<synchronous>, transform_indices = @transform_4, window_bounds = array<i64: 1, 128>}, {transform_indices = @transform_5, window_bounds = array<i64: 1, 1, 128>}]} {
    %c0 = arith.constant 0 : index
    %c0_0 = arith.constant 0 : index
    %0 = vector.load %arg2[%c0, %c0_0] : memref<4x36xbf16, #tpu.memory_space<vmem>>, vector<4x36xbf16>
    %c0_1 = arith.constant 0 : index
    %c0_2 = arith.constant 0 : index
    %1 = vector.load %arg1[%c0_1, %c0_2] : memref<36x256xbf16, #tpu.memory_space<vmem>>, vector<36x256xbf16>
    %cst = arith.constant dense<0.000000e+00> : vector<4x256xf32>
    %2 = tpu.matmul %0, %1, %cst {dimension_numbers = #tpu.dot_dimension_numbers<[1], [0], [0], [1], [0, 0, 1, 1], [], []>} : vector<4x36xbf16>, vector<36x256xbf16>, vector<4x256xf32> -> vector<4x256xf32>
    %c0_3 = arith.constant 0 : index
    %c0_4 = arith.constant 0 : index
    %3 = vector.load %arg3[%c0_3, %c0_4] : memref<4x1xf32, #tpu.memory_space<vmem>>, vector<4x1xf32>
    %4 = vector.broadcast %3 : vector<4x1xf32> to vector<4x256xf32>
    %5 = arith.addf %2, %4 : vector<4x256xf32>
    %cst_5 = arith.constant 0.000000e+00 : f32
    %6 = vector.broadcast %cst_5 : f32 to vector<4x256xf32>
    %7 = arith.maximumf %5, %6 : vector<4x256xf32>
    %8 = arith.truncf %7 : vector<4x256xf32> to vector<4x256xbf16>
    %c0_6 = arith.constant 0 : index
    %c0_7 = arith.constant 0 : index
    %9 = vector.load %arg5[%c0_6, %c0_7] : memref<1x128xf32, #tpu.memory_space<vmem>>, vector<1x128xf32>
    %c0_8 = arith.constant 0 : index
    %c0_9 = arith.constant 0 : index
    %c0_10 = arith.constant 0 : index
    %10 = vector.load %arg4[%c0_8, %c0_9, %c0_10] : memref<4x256x128xbf16, #tpu.memory_space<vmem>>, vector<1x256x128xbf16>
    %11 = vector.shape_cast %10 : vector<1x256x128xbf16> to vector<256x128xbf16>
    %c1 = arith.constant 1 : index
    %c0_11 = arith.constant 0 : index
    %c0_12 = arith.constant 0 : index
    %12 = vector.load %arg4[%c1, %c0_11, %c0_12] : memref<4x256x128xbf16, #tpu.memory_space<vmem>>, vector<1x256x128xbf16>
    %13 = vector.shape_cast %12 : vector<1x256x128xbf16> to vector<256x128xbf16>
    %c2 = arith.constant 2 : index
    %c0_13 = arith.constant 0 : index
    %c0_14 = arith.constant 0 : index
    %14 = vector.load %arg4[%c2, %c0_13, %c0_14] : memref<4x256x128xbf16, #tpu.memory_space<vmem>>, vector<1x256x128xbf16>
    %15 = vector.shape_cast %14 : vector<1x256x128xbf16> to vector<256x128xbf16>
    %c3 = arith.constant 3 : index
    %c0_15 = arith.constant 0 : index
    %c0_16 = arith.constant 0 : index
    %16 = vector.load %arg4[%c3, %c0_15, %c0_16] : memref<4x256x128xbf16, #tpu.memory_space<vmem>>, vector<1x256x128xbf16>
    %17 = vector.shape_cast %16 : vector<1x256x128xbf16> to vector<256x128xbf16>
    %18 = vector.extract_strided_slice %8 {offsets = [0, 0], sizes = [1, 256], strides = [1, 1]} : vector<4x256xbf16> to vector<1x256xbf16>
    %cst_17 = arith.constant dense<0.000000e+00> : vector<1x128xf32>
    %19 = tpu.matmul %18, %11, %cst_17 {dimension_numbers = #tpu.dot_dimension_numbers<[1], [0], [0], [1], [0, 0, 1, 1], [], []>} : vector<1x256xbf16>, vector<256x128xbf16>, vector<1x128xf32> -> vector<1x128xf32>
    %20 = arith.addf %9, %19 : vector<1x128xf32>
    %21 = vector.extract_strided_slice %8 {offsets = [1, 0], sizes = [1, 256], strides = [1, 1]} : vector<4x256xbf16> to vector<1x256xbf16>
    %cst_18 = arith.constant dense<0.000000e+00> : vector<1x128xf32>
    %22 = tpu.matmul %21, %13, %cst_18 {dimension_numbers = #tpu.dot_dimension_numbers<[1], [0], [0], [1], [0, 0, 1, 1], [], []>} : vector<1x256xbf16>, vector<256x128xbf16>, vector<1x128xf32> -> vector<1x128xf32>
    %23 = arith.addf %20, %22 : vector<1x128xf32>
    %24 = vector.extract_strided_slice %8 {offsets = [2, 0], sizes = [1, 256], strides = [1, 1]} : vector<4x256xbf16> to vector<1x256xbf16>
    %cst_19 = arith.constant dense<0.000000e+00> : vector<1x128xf32>
    %25 = tpu.matmul %24, %15, %cst_19 {dimension_numbers = #tpu.dot_dimension_numbers<[1], [0], [0], [1], [0, 0, 1, 1], [], []>} : vector<1x256xbf16>, vector<256x128xbf16>, vector<1x128xf32> -> vector<1x128xf32>
    %26 = arith.addf %23, %25 : vector<1x128xf32>
    %27 = vector.extract_strided_slice %8 {offsets = [3, 0], sizes = [1, 256], strides = [1, 1]} : vector<4x256xbf16> to vector<1x256xbf16>
    %cst_20 = arith.constant dense<0.000000e+00> : vector<1x128xf32>
    %28 = tpu.matmul %27, %17, %cst_20 {dimension_numbers = #tpu.dot_dimension_numbers<[1], [0], [0], [1], [0, 0, 1, 1], [], []>} : vector<1x256xbf16>, vector<256x128xbf16>, vector<1x128xf32> -> vector<1x128xf32>
    %29 = arith.addf %26, %28 : vector<1x128xf32>
    %c0_21 = arith.constant 0 : index
    %c0_22 = arith.constant 0 : index
    %c0_23 = arith.constant 0 : index
    %30 = vector.load %arg6[%c0_21, %c0_22, %c0_23] : memref<1x1x128xf32, #tpu.memory_space<vmem>>, vector<1x1x128xf32>
    %31 = vector.shape_cast %30 : vector<1x1x128xf32> to vector<1x128xf32>
    %32 = vector.shape_cast %29 : vector<1x128xf32> to vector<1x1x128xf32>
    tpu.vector_store %arg6[%c0_21, %c0_22, %c0_23], %32 {strides = array<i32>} : memref<1x1x128xf32, #tpu.memory_space<vmem>>, vector<1x1x128xf32>,
    return
  }
  func.func @transform_0(%arg0: i32) -> (i32, i32) {
    %c0_i32 = arith.constant 0 : i32
    %c0_i32_0 = arith.constant 0 : i32
    return %c0_i32, %arg0 : i32, i32
  }
  func.func @transform_1(%arg0: i32) -> (i32, i32) {
    %c0_i32 = arith.constant 0 : i32
    %c0_i32_0 = arith.constant 0 : i32
    %c0_i32_1 = arith.constant 0 : i32
    return %c0_i32, %c0_i32_0 : i32, i32
  }
  func.func @transform_2(%arg0: i32) -> (i32, i32) {
    %c0_i32 = arith.constant 0 : i32
    %c0_i32_0 = arith.constant 0 : i32
    %c0_i32_1 = arith.constant 0 : i32
    return %c0_i32, %c0_i32_0 : i32, i32
  }
  func.func @transform_3(%arg0: i32) -> (i32, i32, i32) {
    %c0_i32 = arith.constant 0 : i32
    %c0_i32_0 = arith.constant 0 : i32
    %c0_i32_1 = arith.constant 0 : i32
    %c0_i32_2 = arith.constant 0 : i32
    return %c0_i32, %c0_i32_0, %c0_i32_1 : i32, i32, i32
  }
  func.func @transform_4(%arg0: i32) -> (i32, i32) {
    %c0_i32 = arith.constant 0 : i32
    %c0_i32_0 = arith.constant 0 : i32
    %c0_i32_1 = arith.constant 0 : i32
    return %c0_i32, %c0_i32_0 : i32, i32
  }
  func.func @transform_5(%arg0: i32) -> (i32, i32, i32) {
    %c0_i32 = arith.constant 0 : i32
    %c0_i32_0 = arith.constant 0 : i32
    %c0_i32_1 = arith.constant 0 : i32
    return %arg0, %c0_i32, %c0_i32_0 : i32, i32, i32
  }
}

</mosaic_0001>

<llo_original>
// kernel: transferred_net_forward.1
$region0: #{transferred_net_forward.1}
  #allocation0 [shape = 'u32[]', space=smem, size = 0x4, offset = 0x4, fixed_abs, tag = 'smem constant byte address 0x4 - core index']
  #allocation1 [shape = 'u32[144,128]{1,0:T(1,128)}', space=vmem, size = 0x12000, scoped, tag = 'internal scratch']
  %s0 = inlined_call_operand.vmem [shape: bf16[36,512], index: 0, kind: input, shape index: {}]
  %s1 = inlined_call_operand.vmem [shape: bf16[4,36], index: 1, kind: input, shape index: {}]
  %s2 = inlined_call_operand.vmem [shape: f32[4,1], index: 2, kind: input, shape index: {}]
  %s3 = inlined_call_operand.vmem [shape: bf16[4,256,128], index: 3, kind: input, shape index: {}]
  %s4 = inlined_call_operand.vmem [shape: f32[1,128], index: 4, kind: input, shape index: {}]
  %s5 = inlined_call_operand.hbm [shape: f32[2,1,128], index: 5, kind: output, shape index: {}]
  %s6 = sld [smem:[#allocation0]]
  $region91: #{transferred_net_forward.1} parent=0
    _
  %s8 = ssub.s32 1, %s6
  %s9 = scalar_select 0, %s8, %s6
  $region1: #{transferred_net_forward.1} parent=0
    #allocation2 [shape = 'u8[40960]{0}', space=vmem, size = 0xa000, scoped, tag = 'input window, operand 0']
    #allocation3 [shape = 'u8[1024]{0}', space=vmem, size = 0x400, scoped, tag = 'output window, operand 0']
    #allocation4 [shape = 's32[2]{0}', space=sflag, size = 0x8, scoped, tag = 'scoped memory for transferred_net_forward.1']
    %10 = vsyncpa [#allocation4], 0
    %s11 = scalar_lea.sflag [#allocation4], 1
    %12 = vsyncpa %s11, 0
    loop: start=0, step=1, limit=4
    $region2: #{transferred_net_forward.1} parent=1 // loop_pre_header
      _
    $region3: #{transferred_net_forward.1} parent=1 // loop_header
      %s14 = sphi 0, %s18
      %p15 = scmp.ge.s32.totalorder %s14, 4
      %s24 = sphi 0, %s26
      %s27 = sphi 0, %s24
      %s28 = sphi 0, %s27
      %s44 = sphi 0, %s28
      %s48 = sphi 0, %s48
      %s50 = sphi 0, %s48
      %s51 = sphi 0, %s50
      %s65 = sphi 0, %s51
      %s69 = sphi 0, %s69
      %s71 = sphi 0, %s69
      %s72 = sphi 0, %s71
      %s86 = sphi 0, %s72
      %s90 = sphi 0, %s90
      %s92 = sphi 0, %s90
      %s93 = sphi 0, %s92
      %s107 = sphi 0, %s93
      %s111 = sphi 0, %s111
      %s113 = sphi 0, %s111
      %s114 = sphi 0, %s113
      %s128 = sphi 0, %s114
      %s134 = sphi 0, %s136
      %s137 = sphi 0, %s134
      %s138 = sphi 0, %s137
      %s154 = sphi 0, %s138
    $region4: #{transferred_net_forward.1} parent=1 // loop_header_branch
      %17 = sbr.rel (%p15) target = $region8
    $region5: #{transferred_net_forward.1} parent=1 // loop_body
      %s19 = ssub.s32 %s14, 1
      %s20 = ssub.s32 %s14, 2
      %s21 = sadd.s32 %s14, 1
      %s22 = ssub.s32 %s14, %s21
      %p23 = scmp.eq.s32.totalorder %s22, 0
      %s25 = sadd.s32 %s24, 1
      %s26 = scalar_select %p23, %s24, %s25
      %p29 = pneg %p23
      %p30 = scmp.eq.s32.totalorder %s14, 1
      %p31 = por %p29, %p30
      %p32 = scmp.ne.s32.totalorder %s24, %s27
      %p33 = scmp.eq.s32.totalorder %s14, 0
      %p34 = por %p32, %p33
      %p35 = scmp.ne.s32.totalorder %s24, %s27
      %p36 = scmp.eq.s32.totalorder %s19, 1
      %p37 = por %p35, %p36
      %p38 = scmp.ne.s32.totalorder %s27, %s28
      %p39 = scmp.eq.s32.totalorder %s19, 0
      %p40 = por %p38, %p39
      %p41 = scmp.ne.s32.totalorder %s27, %s28
      %p42 = scmp.eq.s32.totalorder %s20, 1
      %p43 = por %p41, %p42
      %p45 = scmp.ne.s32.totalorder %s28, %s44
      %p46 = scmp.eq.s32.totalorder %s20, 0
      %p47 = por %p45, %p46
      %s49 = sadd.s32 %s48, 1
      %p52 = scmp.eq.s32.totalorder %s14, 1
      %p53 = scmp.ne.s32.totalorder %s48, %s50
      %p54 = scmp.eq.s32.totalorder %s14, 0
      %p55 = por %p53, %p54
      %p56 = scmp.ne.s32.totalorder %s48, %s50
      %p57 = scmp.eq.s32.totalorder %s19, 1
      %p58 = por %p56, %p57
      %p59 = scmp.ne.s32.totalorder %s50, %s51
      %p60 = scmp.eq.s32.totalorder %s19, 0
      %p61 = por %p59, %p60
      %p62 = scmp.ne.s32.totalorder %s50, %s51
      %p63 = scmp.eq.s32.totalorder %s20, 1
      %p64 = por %p62, %p63
      %p66 = scmp.ne.s32.totalorder %s51, %s65
      %p67 = scmp.eq.s32.totalorder %s20, 0
      %p68 = por %p66, %p67
      %s70 = sadd.s32 %s69, 1
      %p73 = scmp.eq.s32.totalorder %s14, 1
      %p74 = scmp.ne.s32.totalorder %s69, %s71
      %p75 = scmp.eq.s32.totalorder %s14, 0
      %p76 = por %p74, %p75
      %p77 = scmp.ne.s32.totalorder %s69, %s71
      %p78 = scmp.eq.s32.totalorder %s19, 1
      %p79 = por %p77, %p78
      %p80 = scmp.ne.s32.totalorder %s71, %s72
      %p81 = scmp.eq.s32.totalorder %s19, 0
      %p82 = por %p80, %p81
      %p83 = scmp.ne.s32.totalorder %s71, %s72
      %p84 = scmp.eq.s32.totalorder %s20, 1
      %p85 = por %p83, %p84
      %p87 = scmp.ne.s32.totalorder %s72, %s86
      %p88 = scmp.eq.s32.totalorder %s20, 0
      %p89 = por %p87, %p88
      %s91 = sadd.s32 %s90, 1
      %p94 = scmp.eq.s32.totalorder %s14, 1
      %p95 = scmp.ne.s32.totalorder %s90, %s92
      %p96 = scmp.eq.s32.totalorder %s14, 0
      %p97 = por %p95, %p96
      %p98 = scmp.ne.s32.totalorder %s90, %s92
      %p99 = scmp.eq.s32.totalorder %s19, 1
      %p100 = por %p98, %p99
      %p101 = scmp.ne.s32.totalorder %s92, %s93
      %p102 = scmp.eq.s32.totalorder %s19, 0
      %p103 = por %p101, %p102
      %p104 = scmp.ne.s32.totalorder %s92, %s93
      %p105 = scmp.eq.s32.totalorder %s20, 1
      %p106 = por %p104, %p105
      %p108 = scmp.ne.s32.totalorder %s93, %s107
      %p109 = scmp.eq.s32.totalorder %s20, 0
      %p110 = por %p108, %p109
      %s112 = sadd.s32 %s111, 1
      %p115 = scmp.eq.s32.totalorder %s14, 1
      %p116 = scmp.ne.s32.totalorder %s111, %s113
      %p117 = scmp.eq.s32.totalorder %s14, 0
      %p118 = por %p116, %p117
      %p119 = scmp.ne.s32.totalorder %s111, %s113
      %p120 = scmp.eq.s32.totalorder %s19, 1
      %p121 = por %p119, %p120
      %p122 = scmp.ne.s32.totalorder %s113, %s114
      %p123 = scmp.eq.s32.totalorder %s19, 0
      %p124 = por %p122, %p123
      %p125 = scmp.ne.s32.totalorder %s113, %s114
      %p126 = scmp.eq.s32.totalorder %s20, 1
      %p127 = por %p125, %p126
      %p129 = scmp.ne.s32.totalorder %s114, %s128
      %p130 = scmp.eq.s32.totalorder %s20, 0
      %p131 = por %p129, %p130
      %s132 = ssub.s32 %s14, %s21
      %p133 = scmp.eq.s32.totalorder %s132, 0
      %s135 = sadd.s32 %s134, 1
      %s136 = scalar_select %p133, %s134, %s135
      %p139 = pneg %p133
      %p140 = scmp.eq.s32.totalorder %s14, 1
      %p141 = por %p139, %p140
      %p142 = scmp.ne.s32.totalorder %s134, %s137
      %p143 = scmp.eq.s32.totalorder %s14, 0
      %p144 = por %p142, %p143
      %p145 = scmp.ne.s32.totalorder %s134, %s137
      %p146 = scmp.eq.s32.totalorder %s19, 1
      %p147 = por %p145, %p146
      %p148 = scmp.ne.s32.totalorder %s137, %s138
      %p149 = scmp.eq.s32.totalorder %s19, 0
      %p150 = por %p148, %p149
      %p151 = scmp.ne.s32.totalorder %s137, %s138
      %p152 = scmp.eq.s32.totalorder %s20, 1
      %p153 = por %p151, %p152
      %p155 = scmp.ne.s32.totalorder %s138, %s154
      %p156 = scmp.eq.s32.totalorder %s20, 0
      %p157 = por %p155, %p156
      %p158 = scmp.le.s32.totalorder 1, %s14
      %p159 = scmp.lt.s32.totalorder %s14, 3
      %p160 = pnand %p158, %p159
      %p161 = pneg %p160
      // Predicated region
      $region9: #{transferred_net_forward.1} parent=5 // pred_check
        _
      $region10: #{transferred_net_forward.1} parent=5 // pred_check_branch
        %163 = sbr.rel (%p160) target = $region12
      $region11: #{transferred_net_forward.1} parent=5 // pred_region
        %s164 = ssub.s32 %s14, 1
        // Predicated region
        $region13: #{transferred_net_forward.1} parent=11 // pred_check
          %p165 = pneg %p61
        $region14: #{transferred_net_forward.1} parent=11 // pred_check_branch
          %167 = sbr.rel (%p165) target = $region16
        $region15: #{transferred_net_forward.1} parent=11 // pred_region
          _
        $region16: #{transferred_net_forward.1} parent=11 // pred_fallthru
          _
        // Predicated region
        $region17: #{transferred_net_forward.1} parent=11 // pred_check
          %p168 = pneg %p82
        $region18: #{transferred_net_forward.1} parent=11 // pred_check_branch
          %170 = sbr.rel (%p168) target = $region20
        $region19: #{transferred_net_forward.1} parent=11 // pred_region
          _
        $region20: #{transferred_net_forward.1} parent=11 // pred_fallthru
          _
        // Predicated region
        $region21: #{transferred_net_forward.1} parent=11 // pred_check
          %p171 = pneg %p103
        $region22: #{transferred_net_forward.1} parent=11 // pred_check_branch
          %173 = sbr.rel (%p171) target = $region24
        $region23: #{transferred_net_forward.1} parent=11 // pred_region
          _
        $region24: #{transferred_net_forward.1} parent=11 // pred_fallthru
          _
        // Predicated region
        $region25: #{transferred_net_forward.1} parent=11 // pred_check
          %p174 = pneg %p124
        $region26: #{transferred_net_forward.1} parent=11 // pred_check_branch
          %176 = sbr.rel (%p174) target = $region28
        $region27: #{transferred_net_forward.1} parent=11 // pred_region
          _
        $region28: #{transferred_net_forward.1} parent=11 // pred_fallthru
          _
      $region12: #{transferred_net_forward.1} parent=5 // pred_fallthru
        _
      %p177 = scmp.lt.s32.totalorder %s14, 2
      // Predicated region
      $region29: #{transferred_net_forward.1} parent=5 // pred_check
        %p178 = pneg %p177
      $region30: #{transferred_net_forward.1} parent=5 // pred_check_branch
        %180 = sbr.rel (%p178) target = $region32
      $region31: #{transferred_net_forward.1} parent=5 // pred_region
        // Predicated region
        $region33: #{transferred_net_forward.1} parent=31 // pred_check
          %p181 = pneg %p34
        $region34: #{transferred_net_forward.1} parent=31 // pred_check_branch
          %183 = sbr.rel (%p181) target = $region36
        $region35: #{transferred_net_forward.1} parent=31 // pred_region
          %s184 = sand.u32 %s24, 1
          %s185 = sand.u32 %s24, 1
          %s186 = smul.addr %s185, 40
          %s187 = scalar_lea.vmem [#allocation2], %s186
          %s188 = smul.u32 2, %s14
          %s189 = smul.addr %s188, 4
          %s190 = scalar_lea.vmem %s0, %s189
          // Predicated region
          $region37: #{transferred_net_forward.1} parent=35 // pred_check
            _
          $region38: #{transferred_net_forward.1} parent=35 // pred_check_branch
            %192 = sbr.rel (0) target = $region40
          $region39: #{transferred_net_forward.1} parent=35 // pred_region
            // Predicated region
            $region41: #{transferred_net_forward.1} parent=39 // pred_check
              _
            $region42: #{transferred_net_forward.1} parent=39 // pred_check_branch
              %194 = sbr.rel (0) target = $region44
            $region43: #{transferred_net_forward.1} parent=39 // pred_region
              // Predicated region
              $region56: #{transferred_net_forward.1} parent=43 // pred_check
                _
              $region57: #{transferred_net_forward.1} parent=43 // pred_check_branch
                %218 = sbr.rel (0) target = $region59
              $region58: #{transferred_net_forward.1} parent=43 // pred_region
                loop: start=0, step=1, limit=1
                $region60: #{transferred_net_forward.1} parent=58 // loop_pre_header
                  _
                $region61: #{transferred_net_forward.1} parent=58 // loop_header
                  %s220 = sphi 0, %s224
                  %p221 = scmp.ge.s32.totalorder %s220, 1
                  %s225 = sphi %s190, %s190
                  %s226 = sphi %s187, %s187
                $region62: #{transferred_net_forward.1} parent=58 // loop_header_branch
                  %223 = sbr.rel (%p221) target = $region66
                $region63: #{transferred_net_forward.1} parent=58 // loop_body
                  %v227 = vld [vmem:[%s225] sm:$0xff]
                  %228 = vst [vmem:[%s226] sm:$0xff] %v227
                  %v229 = vld [vmem:[%s225 + $0x10] sm:$0xff]
                  %230 = vst [vmem:[%s226 + $0x8] sm:$0xff] %v229
                  %v231 = vld [vmem:[%s225 + $0x20] sm:$0xff]
                  %232 = vst [vmem:[%s226 + $0x10] sm:$0xff] %v231
                  %v233 = vld [vmem:[%s225 + $0x30] sm:$0xff]
                  %234 = vst [vmem:[%s226 + $0x18] sm:$0xff] %v233
                  %v235 = vld [vmem:[%s225 + $0x40] sm:$0xff]
                  %236 = vst [vmem:[%s226 + $0x20] sm:$0xff] %v235
                $region64: #{transferred_net_forward.1} parent=58 // loop_footer
                  %s224 = sadd.s32 1, %s220
                $region65: #{transferred_net_forward.1} parent=58 // loop_footer_branch
                  %219 = sbr.rel target = $region61
                $region66: #{transferred_net_forward.1} parent=58 // loop_exit
                  _
              $region59: #{transferred_net_forward.1} parent=43 // pred_fallthru
                _
              // Predicated region
              $region67: #{transferred_net_forward.1} parent=43 // pred_check
                _
              $region68: #{transferred_net_forward.1} parent=43 // pred_check_branch
                %238 = sbr.rel target = $region70
              $region69: #{transferred_net_forward.1} parent=43 // pred_region
                _
              $region70: #{transferred_net_forward.1} parent=43 // pred_fallthru
                _
            $region44: #{transferred_net_forward.1} parent=39 // pred_fallthru
              _
            // Predicated region
            $region45: #{transferred_net_forward.1} parent=39 // pred_check
              _
            $region46: #{transferred_net_forward.1} parent=39 // pred_check_branch
              %196 = sbr.rel target = $region48
            $region47: #{transferred_net_forward.1} parent=39 // pred_region
              %s198 = ssub.s32 256, 1
              loop: start=0, step=1, limit=1
              $region49: #{transferred_net_forward.1} parent=47 // loop_pre_header
                _
              $region50: #{transferred_net_forward.1} parent=47 // loop_header
                %s200 = sphi 0, %s204
                %p201 = scmp.ge.s32.totalorder %s200, 1
                %s205 = sphi %s190, %s190
                %s206 = sphi %s187, %s187
              $region51: #{transferred_net_forward.1} parent=47 // loop_header_branch
                %203 = sbr.rel (%p201) target = $region55
              $region52: #{transferred_net_forward.1} parent=47 // loop_body
                %v207 = vld [vmem:[%s205] sm:%s198]
                %208 = vst [vmem:[%s206] sm:%s198] %v207
                %v209 = vld [vmem:[%s205 + $0x10] sm:%s198]
                %210 = vst [vmem:[%s206 + $0x8] sm:%s198] %v209
                %v211 = vld [vmem:[%s205 + $0x20] sm:%s198]
                %212 = vst [vmem:[%s206 + $0x10] sm:%s198] %v211
                %v213 = vld [vmem:[%s205 + $0x30] sm:%s198]
                %214 = vst [vmem:[%s206 + $0x18] sm:%s198] %v213
                %v215 = vld [vmem:[%s205 + $0x40] sm:%s198]
                %216 = vst [vmem:[%s206 + $0x20] sm:%s198] %v215
              $region53: #{transferred_net_forward.1} parent=47 // loop_footer
                %s204 = sadd.s32 1, %s200
              $region54: #{transferred_net_forward.1} parent=47 // loop_footer_branch
                %199 = sbr.rel target = $region50
              $region55: #{transferred_net_forward.1} parent=47 // loop_exit
                _
            $region48: #{transferred_net_forward.1} parent=39 // pred_fallthru
              _
          $region40: #{transferred_net_forward.1} parent=35 // pred_fallthru
            _
          %239 = vnop
        $region36: #{transferred_net_forward.1} parent=31 // pred_fallthru
          _
      $region32: #{transferred_net_forward.1} parent=5 // pred_fallthru
        _
      %p240 = scmp.le.s32.totalorder 1, %s14
      %p241 = scmp.lt.s32.totalorder %s14, 3
      %p242 = pnand %p240, %p241
      %p243 = pneg %p242
      // Predicated region
      $region71: #{transferred_net_forward.1} parent=5 // pred_check
        _
      $region72: #{transferred_net_forward.1} parent=5 // pred_check_branch
        %245 = sbr.rel (%p242) target = $region74
      $region73: #{transferred_net_forward.1} parent=5 // pred_region
        %s246 = ssub.s32 %s14, 1
        %s247 = sand.u32 %s27, 1
        %s248 = sand.u32 %s27, 1
        %s249 = smul.addr %s248, 40
        %s250 = scalar_lea.vmem [#allocation2], %s249
        // Predicated region
        $region75: #{transferred_net_forward.1} parent=73 // pred_check
          %p251 = pneg %p40
        $region76: #{transferred_net_forward.1} parent=73 // pred_check_branch
          %253 = sbr.rel (%p251) target = $region78
        $region77: #{transferred_net_forward.1} parent=73 // pred_region
          _
        $region78: #{transferred_net_forward.1} parent=73 // pred_fallthru
          _
        %s254 = sand.u32 %s27, 1
        %s255 = sand.u32 %s27, 1
        %s256 = smul.addr %s255, 40
        %s257 = scalar_lea.vmem [#allocation2], %s256
        %p258 = pneg %p40
        %p259 = pneg %p37
        %p260 = pneg %p61
        %p261 = pneg %p58
        %p262 = pneg %p82
        %p263 = pneg %p79
        %p264 = pneg %p103
        %p265 = pneg %p100
        %p266 = pneg %p124
        %p267 = pneg %p121
        %p268 = pneg %p150
        %p269 = pneg %p147
        %s270 = sand.u32 %s137, 1
        %s271 = scalar_lea.sflag [#allocation4], %s270
        %s272 = sand.u32 %s137, 1
        %s273 = scalar_lea.vmem [#allocation3], %s272
        %s274 = smul.u32 2, %s19
        %v276 = vld [vmem:[%s1] sm:$0x3]
        %v277 = vld [vmem:[%s250] sm:$0xff]
        %v278 = vld [vmem:[%s250 + $0x8] sm:$0xff]
        %v279 = vld [vmem:[%s250 + $0x10] sm:$0xff]
        %v280 = vld [vmem:[%s250 + $0x18] sm:$0xff]
        %v281 = vld [vmem:[%s250 + $0x20] sm:$0x33]
        %v282 = vld [vmem:[%s2] sm:$0xf]
        %284 = vset.pattern.permute.xlu0 0
        %285 = vperm.xlu0 %284, %v282
        %v286 = vpop.permute.xlu0 %285
        %v293 = vunpack.c.l.b16 %v277
        %v294 = vunpack.c.h.b16 %v277
        %v295 = vunpack.c.l.b16 %v278
        %v296 = vunpack.c.h.b16 %v278
        %v297 = vunpack.c.l.b16 %v279
        %v298 = vunpack.c.h.b16 %v279
        %v299 = vunpack.c.l.b16 %v280
        %v300 = vunpack.c.h.b16 %v280
        %v301 = vunpack.c.l.b16 %v281
        %v302 = vunpack.c.h.b16 %v281
        %v303 = vpack.c.b16 %v295, %v293
        %v304 = vpack.c.b16 %v296, %v294
        %v305 = vpack.c.b16 %v299, %v297
        %v306 = vpack.c.b16 %v300, %v298
        %v307 = vpack.c.b16 %v301, %v301
        %v308 = vpack.c.b16 %v302, %v302
        %vm313 = vcmask 293888
        %v315 = vsel %vm313, %v276, 0
        %vm317 = vcmask 1041408
        %v319 = vsel %vm317, %v307, 0
        %v322 = vsel %vm317, %v308, 0
        %324 = vmatprep.subr.bf16.mxu0 0
        %325 = vmatpush1.bf16.msra.mxu0 0
        %326 = vmatprep.subr.bf16.mxu0 0
        %327 = vmatpush1.bf16.msra.mxu0 0
        %328 = vmatprep.subr.bf16.mxu0 0
        %329 = vmatpush1.bf16.msra.mxu0 0
        %330 = vmatprep.subr.bf16.mxu0 0
        %331 = vmatpush1.bf16.msra.mxu0 0
        %332 = vmatprep.subr.bf16.mxu0 0
        %333 = vmatpush1.bf16.msra.mxu0 0
        %334 = vmatprep.subr.bf16.mxu0 %v322
        %335 = vmatpush1.bf16.msra.mxu0 %v319
        %336 = vmatprep.subr.bf16.mxu0 %v306
        %337 = vmatpush1.bf16.msra.mxu0 %v305
        %338 = vmatprep.subr.bf16.mxu0 %v304
        %339 = vmatpush1.bf16.msra.mxu0 %v303
        %340 = vmatprep.subr.bf16.mxu0 0
        %341 = vmatpush2.bf16.msra.mxu0 0
        %342 = vmatprep.subr.bf16.mxu0 0
        %343 = vmatpush2.bf16.msra.mxu0 0
        %344 = vmatprep.subr.bf16.mxu0 0
        %345 = vmatpush2.bf16.msra.mxu0 0
        %346 = vmatprep.subr.bf16.mxu0 0
        %347 = vmatpush2.bf16.msra.mxu0 0
        %348 = vmatprep.subr.bf16.mxu0 0
        %349 = vmatpush2.bf16.msra.mxu0 0
        %350 = vmatprep.subr.bf16.mxu0 0
        %351 = vmatpush2.bf16.msra.mxu0 0
        %352 = vmatprep.subr.bf16.mxu0 0
        %353 = vmatpush2.bf16.msra.mxu0 0
        %354 = vmatprep.subr.bf16.mxu0 0
        %355 = vmatpush2.bf16.msra.mxu0 0
        %356 = vmatprep.mubr.bf16.mxu0 0
        %357 = vmatmul.mubr.bf16.gmra.mxu0 %v315
        %v358 = vpop.f32.mrf.mxu0
        %v359 = vadd.f32 %v286, %v358
        %v360 = vpop.f32.mrf.mxu0
        %v361 = vadd.f32 %v286, %v360
        %v362 = vpop.f32.mrf.mxu0
        %v363 = vpop.f32.mrf.mxu0
        %364 = vdwg.mxu0
        %v365 = vmax.f32 %v359, 0.0
        %v366 = vmax.f32 %v361, 0.0
        %v367 = vpack.c.bf16 %v365, %v365
        %v368 = vpack.c.bf16 %v366, %v366
        %v369 = vld [vmem:[%s4] sm:$0x1]
        %v370 = vld [vmem:[%s3] sm:$0xf]
        %v371 = vld [vmem:[%s3 + $0x4] sm:$0xf]
        %v372 = vld [vmem:[%s3 + $0x8] sm:$0xf]
        %v373 = vld [vmem:[%s3 + $0xc] sm:$0xf]
        %v374 = vld [vmem:[%s3 + $0x10] sm:$0xf]
        %v375 = vld [vmem:[%s3 + $0x14] sm:$0xf]
        %v376 = vld [vmem:[%s3 + $0x18] sm:$0xf]
        %v377 = vld [vmem:[%s3 + $0x1c] sm:$0xf]
        %v378 = vld [vmem:[%s3 + $0x20] sm:$0xf]
        %v379 = vld [vmem:[%s3 + $0x24] sm:$0xf]
        %v380 = vld [vmem:[%s3 + $0x28] sm:$0xf]
        %v381 = vld [vmem:[%s3 + $0x2c] sm:$0xf]
        %v382 = vld [vmem:[%s3 + $0x30] sm:$0xf]
        %v383 = vld [vmem:[%s3 + $0x34] sm:$0xf]
        %v384 = vld [vmem:[%s3 + $0x38] sm:$0xf]
        %v385 = vld [vmem:[%s3 + $0x3c] sm:$0xf]
        %v386 = vld [vmem:[%s3 + $0x40] sm:$0xf]
        %v387 = vld [vmem:[%s3 + $0x44] sm:$0xf]
        %v388 = vld [vmem:[%s3 + $0x48] sm:$0xf]
        %v389 = vld [vmem:[%s3 + $0x4c] sm:$0xf]
        %v390 = vld [vmem:[%s3 + $0x50] sm:$0xf]
        %v391 = vld [vmem:[%s3 + $0x54] sm:$0xf]
        %v392 = vld [vmem:[%s3 + $0x58] sm:$0xf]
        %v393 = vld [vmem:[%s3 + $0x5c] sm:$0xf]
        %v394 = vld [vmem:[%s3 + $0x60] sm:$0xf]
        %v395 = vld [vmem:[%s3 + $0x64] sm:$0xf]
        %v396 = vld [vmem:[%s3 + $0x68] sm:$0xf]
        %v397 = vld [vmem:[%s3 + $0x6c] sm:$0xf]
        %v398 = vld [vmem:[%s3 + $0x70] sm:$0xf]
        %v399 = vld [vmem:[%s3 + $0x74] sm:$0xf]
        %v400 = vld [vmem:[%s3 + $0x78] sm:$0xf]
        %v401 = vld [vmem:[%s3 + $0x7c] sm:$0xf]
        %s402 = scalar_lea.vmem %s3, 128
        %v403 = vld [vmem:[%s402] sm:$0xf]
        %v404 = vld [vmem:[%s402 + $0x4] sm:$0xf]
        %v405 = vld [vmem:[%s402 + $0x8] sm:$0xf]
        %v406 = vld [vmem:[%s402 + $0xc] sm:$0xf]
        %v407 = vld [vmem:[%s402 + $0x10] sm:$0xf]
        %v408 = vld [vmem:[%s402 + $0x14] sm:$0xf]
        %v409 = vld [vmem:[%s402 + $0x18] sm:$0xf]
        %v410 = vld [vmem:[%s402 + $0x1c] sm:$0xf]
        %v411 = vld [vmem:[%s402 + $0x20] sm:$0xf]
        %v412 = vld [vmem:[%s402 + $0x24] sm:$0xf]
        %v413 = vld [vmem:[%s402 + $0x28] sm:$0xf]
        %v414 = vld [vmem:[%s402 + $0x2c] sm:$0xf]
        %v415 = vld [vmem:[%s402 + $0x30] sm:$0xf]
        %v416 = vld [vmem:[%s402 + $0x34] sm:$0xf]
        %v417 = vld [vmem:[%s402 + $0x38] sm:$0xf]
        %v418 = vld [vmem:[%s402 + $0x3c] sm:$0xf]
        %v419 = vld [vmem:[%s402 + $0x40] sm:$0xf]
        %v420 = vld [vmem:[%s402 + $0x44] sm:$0xf]
        %v421 = vld [vmem:[%s402 + $0x48] sm:$0xf]
        %v422 = vld [vmem:[%s402 + $0x4c] sm:$0xf]
        %v423 = vld [vmem:[%s402 + $0x50] sm:$0xf]
        %v424 = vld [vmem:[%s402 + $0x54] sm:$0xf]
        %v425 = vld [vmem:[%s402 + $0x58] sm:$0xf]
        %v426 = vld [vmem:[%s402 + $0x5c] sm:$0xf]
        %v427 = vld [vmem:[%s402 + $0x60] sm:$0xf]
        %v428 = vld [vmem:[%s402 + $0x64] sm:$0xf]
        %v429 = vld [vmem:[%s402 + $0x68] sm:$0xf]
        %v430 = vld [vmem:[%s402 + $0x6c] sm:$0xf]
        %v431 = vld [vmem:[%s402 + $0x70] sm:$0xf]
        %v432 = vld [vmem:[%s402 + $0x74] sm:$0xf]
        %v433 = vld [vmem:[%s402 + $0x78] sm:$0xf]
        %v434 = vld [vmem:[%s402 + $0x7c] sm:$0xf]
        %s435 = scalar_lea.vmem %s3, 256
        %v436 = vld [vmem:[%s435] sm:$0xf]
        %v437 = vld [vmem:[%s435 + $0x4] sm:$0xf]
        %v438 = vld [vmem:[%s435 + $0x8] sm:$0xf]
        %v439 = vld [vmem:[%s435 + $0xc] sm:$0xf]
        %v440 = vld [vmem:[%s435 + $0x10] sm:$0xf]
        %v441 = vld [vmem:[%s435 + $0x14] sm:$0xf]
        %v442 = vld [vmem:[%s435 + $0x18] sm:$0xf]
        %v443 = vld [vmem:[%s435 + $0x1c] sm:$0xf]
        %v444 = vld [vmem:[%s435 + $0x20] sm:$0xf]
        %v445 = vld [vmem:[%s435 + $0x24] sm:$0xf]
        %v446 = vld [vmem:[%s435 + $0x28] sm:$0xf]
        %v447 = vld [vmem:[%s435 + $0x2c] sm:$0xf]
        %v448 = vld [vmem:[%s435 + $0x30] sm:$0xf]
        %v449 = vld [vmem:[%s435 + $0x34] sm:$0xf]
        %v450 = vld [vmem:[%s435 + $0x38] sm:$0xf]
        %v451 = vld [vmem:[%s435 + $0x3c] sm:$0xf]
        %v452 = vld [vmem:[%s435 + $0x40] sm:$0xf]
        %v453 = vld [vmem:[%s435 + $0x44] sm:$0xf]
        %v454 = vld [vmem:[%s435 + $0x48] sm:$0xf]
        %v455 = vld [vmem:[%s435 + $0x4c] sm:$0xf]
        %v456 = vld [vmem:[%s435 + $0x50] sm:$0xf]
        %v457 = vld [vmem:[%s435 + $0x54] sm:$0xf]
        %v458 = vld [vmem:[%s435 + $0x58] sm:$0xf]
        %v459 = vld [vmem:[%s435 + $0x5c] sm:$0xf]
        %v460 = vld [vmem:[%s435 + $0x60] sm:$0xf]
        %v461 = vld [vmem:[%s435 + $0x64] sm:$0xf]
        %v462 = vld [vmem:[%s435 + $0x68] sm:$0xf]
        %v463 = vld [vmem:[%s435 + $0x6c] sm:$0xf]
        %v464 = vld [vmem:[%s435 + $0x70] sm:$0xf]
        %v465 = vld [vmem:[%s435 + $0x74] sm:$0xf]
        %v466 = vld [vmem:[%s435 + $0x78] sm:$0xf]
        %v467 = vld [vmem:[%s435 + $0x7c] sm:$0xf]
        %s468 = scalar_lea.vmem %s3, 384
        %v469 = vld [vmem:[%s468] sm:$0xf]
        %v470 = vld [vmem:[%s468 + $0x4] sm:$0xf]
        %v471 = vld [vmem:[%s468 + $0x8] sm:$0xf]
        %v472 = vld [vmem:[%s468 + $0xc] sm:$0xf]
        %v473 = vld [vmem:[%s468 + $0x10] sm:$0xf]
        %v474 = vld [vmem:[%s468 + $0x14] sm:$0xf]
        %v475 = vld [vmem:[%s468 + $0x18] sm:$0xf]
        %v476 = vld [vmem:[%s468 + $0x1c] sm:$0xf]
        %v477 = vld [vmem:[%s468 + $0x20] sm:$0xf]
        %v478 = vld [vmem:[%s468 + $0x24] sm:$0xf]
        %v479 = vld [vmem:[%s468 + $0x28] sm:$0xf]
        %v480 = vld [vmem:[%s468 + $0x2c] sm:$0xf]
        %v481 = vld [vmem:[%s468 + $0x30] sm:$0xf]
        %v482 = vld [vmem:[%s468 + $0x34] sm:$0xf]
        %v483 = vld [vmem:[%s468 + $0x38] sm:$0xf]
        %v484 = vld [vmem:[%s468 + $0x3c] sm:$0xf]
        %v485 = vld [vmem:[%s468 + $0x40] sm:$0xf]
        %v486 = vld [vmem:[%s468 + $0x44] sm:$0xf]
        %v487 = vld [vmem:[%s468 + $0x48] sm:$0xf]
        %v488 = vld [vmem:[%s468 + $0x4c] sm:$0xf]
        %v489 = vld [vmem:[%s468 + $0x50] sm:$0xf]
        %v490 = vld [vmem:[%s468 + $0x54] sm:$0xf]
        %v491 = vld [vmem:[%s468 + $0x58] sm:$0xf]
        %v492 = vld [vmem:[%s468 + $0x5c] sm:$0xf]
        %v493 = vld [vmem:[%s468 + $0x60] sm:$0xf]
        %v494 = vld [vmem:[%s468 + $0x64] sm:$0xf]
        %v495 = vld [vmem:[%s468 + $0x68] sm:$0xf]
        %v496 = vld [vmem:[%s468 + $0x6c] sm:$0xf]
        %v497 = vld [vmem:[%s468 + $0x70] sm:$0xf]
        %v498 = vld [vmem:[%s468 + $0x74] sm:$0xf]
        %v499 = vld [vmem:[%s468 + $0x78] sm:$0xf]
        %v500 = vld [vmem:[%s468 + $0x7c] sm:$0xf]
        %v533 = vunpack.c.l.b16 %v370
        %v534 = vunpack.c.l.b16 %v371
        %v535 = vunpack.c.l.b16 %v372
        %v536 = vunpack.c.l.b16 %v373
        %v537 = vunpack.c.l.b16 %v374
        %v538 = vunpack.c.l.b16 %v375
        %v539 = vunpack.c.l.b16 %v376
        %v540 = vunpack.c.l.b16 %v377
        %v541 = vunpack.c.l.b16 %v378
        %v542 = vunpack.c.l.b16 %v379
        %v543 = vunpack.c.l.b16 %v380
        %v544 = vunpack.c.l.b16 %v381
        %v545 = vunpack.c.l.b16 %v382
        %v546 = vunpack.c.l.b16 %v383
        %v547 = vunpack.c.l.b16 %v384
        %v548 = vunpack.c.l.b16 %v385
        %v549 = vunpack.c.l.b16 %v386
        %v550 = vunpack.c.l.b16 %v387
        %v551 = vunpack.c.l.b16 %v388
        %v552 = vunpack.c.l.b16 %v389
        %v553 = vunpack.c.l.b16 %v390
        %v554 = vunpack.c.l.b16 %v391
        %v555 = vunpack.c.l.b16 %v392
        %v556 = vunpack.c.l.b16 %v393
        %v557 = vunpack.c.l.b16 %v394
        %v558 = vunpack.c.l.b16 %v395
        %v559 = vunpack.c.l.b16 %v396
        %v560 = vunpack.c.l.b16 %v397
        %v561 = vunpack.c.l.b16 %v398
        %v562 = vunpack.c.l.b16 %v399
        %v563 = vunpack.c.l.b16 %v400
        %v564 = vunpack.c.l.b16 %v401
        %v565 = vpack.c.b16 %v534, %v533
        %v566 = vpack.c.b16 %v536, %v535
        %v567 = vpack.c.b16 %v538, %v537
        %v568 = vpack.c.b16 %v540, %v539
        %v569 = vpack.c.b16 %v542, %v541
        %v570 = vpack.c.b16 %v544, %v543
        %v571 = vpack.c.b16 %v546, %v545
        %v572 = vpack.c.b16 %v548, %v547
        %v573 = vpack.c.b16 %v550, %v549
        %v574 = vpack.c.b16 %v552, %v551
        %v575 = vpack.c.b16 %v554, %v553
        %v576 = vpack.c.b16 %v556, %v555
        %v577 = vpack.c.b16 %v558, %v557
        %v578 = vpack.c.b16 %v560, %v559
        %v579 = vpack.c.b16 %v562, %v561
        %v580 = vpack.c.b16 %v564, %v563
        %597 = vmatprep.subr.bf16.mxu0 0
        %598 = vmatpush1.bf16.msra.mxu0 %v572
        %599 = vmatprep.subr.bf16.mxu0 0
        %600 = vmatpush1.bf16.msra.mxu0 %v571
        %601 = vmatprep.subr.bf16.mxu0 0
        %602 = vmatpush1.bf16.msra.mxu0 %v570
        %603 = vmatprep.subr.bf16.mxu0 0
        %604 = vmatpush1.bf16.msra.mxu0 %v569
        %605 = vmatprep.subr.bf16.mxu0 0
        %606 = vmatpush1.bf16.msra.mxu0 %v568
        %607 = vmatprep.subr.bf16.mxu0 0
        %608 = vmatpush1.bf16.msra.mxu0 %v567
        %609 = vmatprep.subr.bf16.mxu0 0
        %610 = vmatpush1.bf16.msra.mxu0 %v566
        %611 = vmatprep.subr.bf16.mxu0 0
        %612 = vmatpush1.bf16.msra.mxu0 %v565
        %613 = vmatprep.subr.bf16.mxu0 0
        %614 = vmatpush2.bf16.msra.mxu0 %v580
        %615 = vmatprep.subr.bf16.mxu0 0
        %616 = vmatpush2.bf16.msra.mxu0 %v579
        %617 = vmatprep.subr.bf16.mxu0 0
        %618 = vmatpush2.bf16.msra.mxu0 %v578
        %619 = vmatprep.subr.bf16.mxu0 0
        %620 = vmatpush2.bf16.msra.mxu0 %v577
        %621 = vmatprep.subr.bf16.mxu0 0
        %622 = vmatpush2.bf16.msra.mxu0 %v576
        %623 = vmatprep.subr.bf16.mxu0 0
        %624 = vmatpush2.bf16.msra.mxu0 %v575
        %625 = vmatprep.subr.bf16.mxu0 0
        %626 = vmatpush2.bf16.msra.mxu0 %v574
        %627 = vmatprep.subr.bf16.mxu0 0
        %628 = vmatpush2.bf16.msra.mxu0 %v573
        %629 = vmatprep.mubr.bf16.mxu0 %v368
        %630 = vmatmul.mubr.bf16.gmra.mxu0 %v367
        %v631 = vpop.f32.mrf.mxu0
        %v632 = vadd.f32 0.0, %v631
        %v633 = vpop.f32.mrf.mxu0
        %v634 = vpop.f32.mrf.mxu0
        %v635 = vpop.f32.mrf.mxu0
        %636 = vdwg.mxu0
        %v637 = vadd.f32 %v369, %v632
        %v639 = vshrl.u32 %v367, 16
        %v642 = vshrl.u32 %v368, 16
        %v678 = vunpack.c.l.b16 %v403
        %v679 = vunpack.c.l.b16 %v404
        %v680 = vunpack.c.l.b16 %v405
        %v681 = vunpack.c.l.b16 %v406
        %v682 = vunpack.c.l.b16 %v407
        %v683 = vunpack.c.l.b16 %v408
        %v684 = vunpack.c.l.b16 %v409
        %v685 = vunpack.c.l.b16 %v410
        %v686 = vunpack.c.l.b16 %v411
        %v687 = vunpack.c.l.b16 %v412
        %v688 = vunpack.c.l.b16 %v413
        %v689 = vunpack.c.l.b16 %v414
        %v690 = vunpack.c.l.b16 %v415
        %v691 = vunpack.c.l.b16 %v416
        %v692 = vunpack.c.l.b16 %v417
        %v693 = vunpack.c.l.b16 %v418
        %v694 = vunpack.c.l.b16 %v419
        %v695 = vunpack.c.l.b16 %v420
        %v696 = vunpack.c.l.b16 %v421
        %v697 = vunpack.c.l.b16 %v422
        %v698 = vunpack.c.l.b16 %v423
        %v699 = vunpack.c.l.b16 %v424
        %v700 = vunpack.c.l.b16 %v425
        %v701 = vunpack.c.l.b16 %v426
        %v702 = vunpack.c.l.b16 %v427
        %v703 = vunpack.c.l.b16 %v428
        %v704 = vunpack.c.l.b16 %v429
        %v705 = vunpack.c.l.b16 %v430
        %v706 = vunpack.c.l.b16 %v431
        %v707 = vunpack.c.l.b16 %v432
        %v708 = vunpack.c.l.b16 %v433
        %v709 = vunpack.c.l.b16 %v434
        %v710 = vpack.c.b16 %v679, %v678
        %v711 = vpack.c.b16 %v681, %v680
        %v712 = vpack.c.b16 %v683, %v682
        %v713 = vpack.c.b16 %v685, %v684
        %v714 = vpack.c.b16 %v687, %v686
        %v715 = vpack.c.b16 %v689, %v688
        %v716 = vpack.c.b16 %v691, %v690
        %v717 = vpack.c.b16 %v693, %v692
        %v718 = vpack.c.b16 %v695, %v694
        %v719 = vpack.c.b16 %v697, %v696
        %v720 = vpack.c.b16 %v699, %v698
        %v721 = vpack.c.b16 %v701, %v700
        %v722 = vpack.c.b16 %v703, %v702
        %v723 = vpack.c.b16 %v705, %v704
        %v724 = vpack.c.b16 %v707, %v706
        %v725 = vpack.c.b16 %v709, %v708
        %742 = vmatprep.subr.bf16.mxu0 0
        %743 = vmatpush1.bf16.msra.mxu0 %v717
        %744 = vmatprep.subr.bf16.mxu0 0
        %745 = vmatpush1.bf16.msra.mxu0 %v716
        %746 = vmatprep.subr.bf16.mxu0 0
        %747 = vmatpush1.bf16.msra.mxu0 %v715
        %748 = vmatprep.subr.bf16.mxu0 0
        %749 = vmatpush1.bf16.msra.mxu0 %v714
        %750 = vmatprep.subr.bf16.mxu0 0
        %751 = vmatpush1.bf16.msra.mxu0 %v713
        %752 = vmatprep.subr.bf16.mxu0 0
        %753 = vmatpush1.bf16.msra.mxu0 %v712
        %754 = vmatprep.subr.bf16.mxu0 0
        %755 = vmatpush1.bf16.msra.mxu0 %v711
        %756 = vmatprep.subr.bf16.mxu0 0
        %757 = vmatpush1.bf16.msra.mxu0 %v710
        %758 = vmatprep.subr.bf16.mxu0 0
        %759 = vmatpush2.bf16.msra.mxu0 %v725
        %760 = vmatprep.subr.bf16.mxu0 0
        %761 = vmatpush2.bf16.msra.mxu0 %v724
        %762 = vmatprep.subr.bf16.mxu0 0
        %763 = vmatpush2.bf16.msra.mxu0 %v723
        %764 = vmatprep.subr.bf16.mxu0 0
        %765 = vmatpush2.bf16.msra.mxu0 %v722
        %766 = vmatprep.subr.bf16.mxu0 0
        %767 = vmatpush2.bf16.msra.mxu0 %v721
        %768 = vmatprep.subr.bf16.mxu0 0
        %769 = vmatpush2.bf16.msra.mxu0 %v720
        %770 = vmatprep.subr.bf16.mxu0 0
        %771 = vmatpush2.bf16.msra.mxu0 %v719
        %772 = vmatprep.subr.bf16.mxu0 0
        %773 = vmatpush2.bf16.msra.mxu0 %v718
        %774 = vmatprep.mubr.bf16.mxu0 %v642
        %775 = vmatmul.mubr.bf16.gmra.mxu0 %v639
        %v776 = vpop.f32.mrf.mxu0
        %v777 = vadd.f32 0.0, %v776
        %v778 = vpop.f32.mrf.mxu0
        %v779 = vpop.f32.mrf.mxu0
        %v780 = vpop.f32.mrf.mxu0
        %781 = vdwg.mxu0
        %v782 = vadd.f32 %v637, %v777
        %v785 = vrot.slane %v367, 1
        %v786 = vrot.slane %v368, 1
        %v821 = vunpack.c.l.b16 %v436
        %v822 = vunpack.c.l.b16 %v437
        %v823 = vunpack.c.l.b16 %v438
        %v824 = vunpack.c.l.b16 %v439
        %v825 = vunpack.c.l.b16 %v440
        %v826 = vunpack.c.l.b16 %v441
        %v827 = vunpack.c.l.b16 %v442
        %v828 = vunpack.c.l.b16 %v443
        %v829 = vunpack.c.l.b16 %v444
        %v830 = vunpack.c.l.b16 %v445
        %v831 = vunpack.c.l.b16 %v446
        %v832 = vunpack.c.l.b16 %v447
        %v833 = vunpack.c.l.b16 %v448
        %v834 = vunpack.c.l.b16 %v449
        %v835 = vunpack.c.l.b16 %v450
        %v836 = vunpack.c.l.b16 %v451
        %v837 = vunpack.c.l.b16 %v452
        %v838 = vunpack.c.l.b16 %v453
        %v839 = vunpack.c.l.b16 %v454
        %v840 = vunpack.c.l.b16 %v455
        %v841 = vunpack.c.l.b16 %v456
        %v842 = vunpack.c.l.b16 %v457
        %v843 = vunpack.c.l.b16 %v458
        %v844 = vunpack.c.l.b16 %v459
        %v845 = vunpack.c.l.b16 %v460
        %v846 = vunpack.c.l.b16 %v461
        %v847 = vunpack.c.l.b16 %v462
        %v848 = vunpack.c.l.b16 %v463
        %v849 = vunpack.c.l.b16 %v464
        %v850 = vunpack.c.l.b16 %v465
        %v851 = vunpack.c.l.b16 %v466
        %v852 = vunpack.c.l.b16 %v467
        %v853 = vpack.c.b16 %v822, %v821
        %v854 = vpack.c.b16 %v824, %v823
        %v855 = vpack.c.b16 %v826, %v825
        %v856 = vpack.c.b16 %v828, %v827
        %v857 = vpack.c.b16 %v830, %v829
        %v858 = vpack.c.b16 %v832, %v831
        %v859 = vpack.c.b16 %v834, %v833
        %v860 = vpack.c.b16 %v836, %v835
        %v861 = vpack.c.b16 %v838, %v837
        %v862 = vpack.c.b16 %v840, %v839
        %v863 = vpack.c.b16 %v842, %v841
        %v864 = vpack.c.b16 %v844, %v843
        %v865 = vpack.c.b16 %v846, %v845
        %v866 = vpack.c.b16 %v848, %v847
        %v867 = vpack.c.b16 %v850, %v849
        %v868 = vpack.c.b16 %v852, %v851
        %885 = vmatprep.subr.bf16.mxu0 0
        %886 = vmatpush1.bf16.msra.mxu0 %v860
        %887 = vmatprep.subr.bf16.mxu0 0
        %888 = vmatpush1.bf16.msra.mxu0 %v859
        %889 = vmatprep.subr.bf16.mxu0 0
        %890 = vmatpush1.bf16.msra.mxu0 %v858
        %891 = vmatprep.subr.bf16.mxu0 0
        %892 = vmatpush1.bf16.msra.mxu0 %v857
        %893 = vmatprep.subr.bf16.mxu0 0
        %894 = vmatpush1.bf16.msra.mxu0 %v856
        %895 = vmatprep.subr.bf16.mxu0 0
        %896 = vmatpush1.bf16.msra.mxu0 %v855
        %897 = vmatprep.subr.bf16.mxu0 0
        %898 = vmatpush1.bf16.msra.mxu0 %v854
        %899 = vmatprep.subr.bf16.mxu0 0
        %900 = vmatpush1.bf16.msra.mxu0 %v853
        %901 = vmatprep.subr.bf16.mxu0 0
        %902 = vmatpush2.bf16.msra.mxu0 %v868
        %903 = vmatprep.subr.bf16.mxu0 0
        %904 = vmatpush2.bf16.msra.mxu0 %v867
        %905 = vmatprep.subr.bf16.mxu0 0
        %906 = vmatpush2.bf16.msra.mxu0 %v866
        %907 = vmatprep.subr.bf16.mxu0 0
        %908 = vmatpush2.bf16.msra.mxu0 %v865
        %909 = vmatprep.subr.bf16.mxu0 0
        %910 = vmatpush2.bf16.msra.mxu0 %v864
        %911 = vmatprep.subr.bf16.mxu0 0
        %912 = vmatpush2.bf16.msra.mxu0 %v863
        %913 = vmatprep.subr.bf16.mxu0 0
        %914 = vmatpush2.bf16.msra.mxu0 %v862
        %915 = vmatprep.subr.bf16.mxu0 0
        %916 = vmatpush2.bf16.msra.mxu0 %v861
        %917 = vmatprep.mubr.bf16.mxu0 %v786
        %918 = vmatmul.mubr.bf16.gmra.mxu0 %v785
        %v919 = vpop.f32.mrf.mxu0
        %v920 = vadd.f32 0.0, %v919
        %v921 = vpop.f32.mrf.mxu0
        %v922 = vpop.f32.mrf.mxu0
        %v923 = vpop.f32.mrf.mxu0
        %924 = vdwg.mxu0
        %v925 = vadd.f32 %v782, %v920
        %v926 = vrot.slane %v639, 1
        %v927 = vrot.slane %v642, 1
        %v962 = vunpack.c.l.b16 %v469
        %v963 = vunpack.c.l.b16 %v470
        %v964 = vunpack.c.l.b16 %v471
        %v965 = vunpack.c.l.b16 %v472
        %v966 = vunpack.c.l.b16 %v473
        %v967 = vunpack.c.l.b16 %v474
        %v968 = vunpack.c.l.b16 %v475
        %v969 = vunpack.c.l.b16 %v476
        %v970 = vunpack.c.l.b16 %v477
        %v971 = vunpack.c.l.b16 %v478
        %v972 = vunpack.c.l.b16 %v479
        %v973 = vunpack.c.l.b16 %v480
        %v974 = vunpack.c.l.b16 %v481
        %v975 = vunpack.c.l.b16 %v482
        %v976 = vunpack.c.l.b16 %v483
        %v977 = vunpack.c.l.b16 %v484
        %v978 = vunpack.c.l.b16 %v485
        %v979 = vunpack.c.l.b16 %v486
        %v980 = vunpack.c.l.b16 %v487
        %v981 = vunpack.c.l.b16 %v488
        %v982 = vunpack.c.l.b16 %v489
        %v983 = vunpack.c.l.b16 %v490
        %v984 = vunpack.c.l.b16 %v491
        %v985 = vunpack.c.l.b16 %v492
        %v986 = vunpack.c.l.b16 %v493
        %v987 = vunpack.c.l.b16 %v494
        %v988 = vunpack.c.l.b16 %v495
        %v989 = vunpack.c.l.b16 %v496
        %v990 = vunpack.c.l.b16 %v497
        %v991 = vunpack.c.l.b16 %v498
        %v992 = vunpack.c.l.b16 %v499
        %v993 = vunpack.c.l.b16 %v500
        %v994 = vpack.c.b16 %v963, %v962
        %v995 = vpack.c.b16 %v965, %v964
        %v996 = vpack.c.b16 %v967, %v966
        %v997 = vpack.c.b16 %v969, %v968
        %v998 = vpack.c.b16 %v971, %v970
        %v999 = vpack.c.b16 %v973, %v972
        %v1000 = vpack.c.b16 %v975, %v974
        %v1001 = vpack.c.b16 %v977, %v976
        %v1002 = vpack.c.b16 %v979, %v978
        %v1003 = vpack.c.b16 %v981, %v980
        %v1004 = vpack.c.b16 %v983, %v982
        %v1005 = vpack.c.b16 %v985, %v984
        %v1006 = vpack.c.b16 %v987, %v986
        %v1007 = vpack.c.b16 %v989, %v988
        %v1008 = vpack.c.b16 %v991, %v990
        %v1009 = vpack.c.b16 %v993, %v992
        %1026 = vmatprep.subr.bf16.mxu0 0
        %1027 = vmatpush1.bf16.msra.mxu0 %v1001
        %1028 = vmatprep.subr.bf16.mxu0 0
        %1029 = vmatpush1.bf16.msra.mxu0 %v1000
        %1030 = vmatprep.subr.bf16.mxu0 0
        %1031 = vmatpush1.bf16.msra.mxu0 %v999
        %1032 = vmatprep.subr.bf16.mxu0 0
        %1033 = vmatpush1.bf16.msra.mxu0 %v998
        %1034 = vmatprep.subr.bf16.mxu0 0
        %1035 = vmatpush1.bf16.msra.mxu0 %v997
        %1036 = vmatprep.subr.bf16.mxu0 0
        %1037 = vmatpush1.bf16.msra.mxu0 %v996
        %1038 = vmatprep.subr.bf16.mxu0 0
        %1039 = vmatpush1.bf16.msra.mxu0 %v995
        %1040 = vmatprep.subr.bf16.mxu0 0
        %1041 = vmatpush1.bf16.msra.mxu0 %v994
        %1042 = vmatprep.subr.bf16.mxu0 0
        %1043 = vmatpush2.bf16.msra.mxu0 %v1009
        %1044 = vmatprep.subr.bf16.mxu0 0
        %1045 = vmatpush2.bf16.msra.mxu0 %v1008
        %1046 = vmatprep.subr.bf16.mxu0 0
        %1047 = vmatpush2.bf16.msra.mxu0 %v1007
        %1048 = vmatprep.subr.bf16.mxu0 0
        %1049 = vmatpush2.bf16.msra.mxu0 %v1006
        %1050 = vmatprep.subr.bf16.mxu0 0
        %1051 = vmatpush2.bf16.msra.mxu0 %v1005
        %1052 = vmatprep.subr.bf16.mxu0 0
        %1053 = vmatpush2.bf16.msra.mxu0 %v1004
        %1054 = vmatprep.subr.bf16.mxu0 0
        %1055 = vmatpush2.bf16.msra.mxu0 %v1003
        %1056 = vmatprep.subr.bf16.mxu0 0
        %1057 = vmatpush2.bf16.msra.mxu0 %v1002
        %1058 = vmatprep.mubr.bf16.mxu0 %v927
        %1059 = vmatmul.mubr.bf16.gmra.mxu0 %v926
        %v1060 = vpop.f32.mrf.mxu0
        %v1061 = vadd.f32 0.0, %v1060
        %v1062 = vpop.f32.mrf.mxu0
        %v1063 = vpop.f32.mrf.mxu0
        %v1064 = vpop.f32.mrf.mxu0
        %1065 = vdwg.mxu0
        %v1066 = vadd.f32 %v925, %v1061
        %1067 = vst [vmem:[%s273] sm:$0x1] %v1066
        %s1068 = sand.u32 %s137, 1
        %s1069 = scalar_lea.sflag [#allocation4], %s1068
        %s1070 = sand.u32 %s137, 1
        %s1071 = scalar_lea.vmem [#allocation3], %s1070
        // Predicated region
        $region79: #{transferred_net_forward.1} parent=73 // pred_check
          %p1072 = pneg %p147
        $region80: #{transferred_net_forward.1} parent=73 // pred_check_branch
          %1074 = sbr.rel (%p1072) target = $region82
        $region81: #{transferred_net_forward.1} parent=73 // pred_region
          %s1076 = ssub.s32 16, 16
          %1077 = vsyncadd %s1069, %s1076
          %s1078 = smul.addr %s19, 16
          %s1079 = scalar_lea.hbm %s5, %s1078
          %s1081 = sshll.u32 %s1071, 4
          %s1082 = int_to_ptr.vmem [resolvable:$true] %s1081
          %1084 = dma.vmem_to_hbm [thread:$0]  %s1082, 16, %s1079, %s1069
        $region82: #{transferred_net_forward.1} parent=73 // pred_fallthru
          _
      $region74: #{transferred_net_forward.1} parent=5 // pred_fallthru
        _
      %p1085 = scmp.le.s32.totalorder 2, %s14
      // Predicated region
      $region83: #{transferred_net_forward.1} parent=5 // pred_check
        %p1086 = pneg %p1085
      $region84: #{transferred_net_forward.1} parent=5 // pred_check_branch
        %1088 = sbr.rel (%p1086) target = $region86
      $region85: #{transferred_net_forward.1} parent=5 // pred_region
        %s1089 = ssub.s32 %s14, 2
        // Predicated region
        $region87: #{transferred_net_forward.1} parent=85 // pred_check
          %p1090 = pneg %p153
        $region88: #{transferred_net_forward.1} parent=85 // pred_check_branch
          %1092 = sbr.rel (%p1090) target = $region90
        $region89: #{transferred_net_forward.1} parent=85 // pred_region
          %s1093 = sand.u32 %s138, 1
          %s1094 = scalar_lea.sflag [#allocation4], %s1093
          %s1095 = sand.u32 %s138, 1
          %s1096 = scalar_lea.vmem [#allocation3], %s1095
          %1097 = dma.done %s1094, 16
        $region90: #{transferred_net_forward.1} parent=85 // pred_fallthru
          _
      $region86: #{transferred_net_forward.1} parent=5 // pred_fallthru
        _
    $region6: #{transferred_net_forward.1} parent=1 // loop_footer
      %s18 = sadd.s32 1, %s14
    $region7: #{transferred_net_forward.1} parent=1 // loop_footer_branch
      %13 = sbr.rel target = $region3
    $region8: #{transferred_net_forward.1} parent=1 // loop_exit
      _
    %1098 = vsyncpa [#allocation4], 1
    %s1099 = scalar_lea.sflag [#allocation4], 1
    %1100 = vsyncpa %s1099, 1

</llo_original>
